<compile_context>
chip_gen: v6e
topology: v6e:2x2x1
jax: 0.10.0
libtpu: 0.0.40
codegen_flags: <defaults>
</compile_context>

<pallas_src>
import math
import functools

import jax
import jax.numpy as jnp
from jax.experimental import pallas as pl
from jax.experimental.pallas import tpu as pltpu


LANE = 128      # pad feature (last) dims to a multiple of this
SUBLANE = 8     # pad row dims (f32) to a multiple of this


def _rup(n, m):
    return ((n + m - 1) // m) * m


def _pad2(a, rows, cols):
    return jnp.pad(a, ((0, rows - a.shape[0]), (0, cols - a.shape[1])))


# ----------------------------------------------------------------------------
# Fused forward kernel
# refs layout (all VMEM, full-array blocks, no grid):
#   x_pad,
#   [enc_w, enc_b] * n_enc,
#   head_w, head_b,                 (merged mu||logvar head)
#   eps_pad,                        (L, B_pad, k_pad)
#   [dec_w, dec_b] * n_dec,
#   recon_out, mu_out, logvar_out
# ----------------------------------------------------------------------------
def _vae_fused_kernel(*refs, n_enc, n_dec, L, k_pad):
    it = iter(refs)
    x_ref = next(it)
    enc = [(next(it), next(it)) for _ in range(n_enc)]
    head_w_ref, head_b_ref = next(it), next(it)
    eps_ref = next(it)
    dec = [(next(it), next(it)) for _ in range(n_dec)]
    recon_ref, mu_ref, logvar_ref = next(it), next(it), next(it)

    # ---- encoder: h = relu(h @ W + b) ----
    h = x_ref[...]
    for w_ref, b_ref in enc:
        h = jnp.dot(h, w_ref[...], preferred_element_type=jnp.float32)
        h = jnp.maximum(h + b_ref[...], 0.0)

    # ---- merged mu / logvar head: one matmul, lanes [0:k_pad)=mu, [k_pad:)=logvar ----
    head = jnp.dot(h, head_w_ref[...], preferred_element_type=jnp.float32)
    head = head + head_b_ref[...]
    mu = head[:, :k_pad]
    logvar = head[:, k_pad:]
    mu_ref[...] = mu.astype(mu_ref.dtype)
    logvar_ref[...] = logvar.astype(logvar_ref.dtype)

    # ---- reparameterize: z = eps * exp(0.5*logvar) + mu, flattened to (L*B_pad, k_pad) ----
    std = jnp.exp(0.5 * logvar)                    # EUP; f32
    z = jnp.concatenate([eps_ref[i] * std + mu for i in range(L)], axis=0)

    # ---- decoder: relu hidden layers, sigmoid on the last ----
    h = z
    for i, (w_ref, b_ref) in enumerate(dec):
        h = jnp.dot(h, w_ref[...], preferred_element_type=jnp.float32)
        h = h + b_ref[...]
        if i < n_dec - 1:
            h = jnp.maximum(h, 0.0)
        else:
            h = jax.nn.sigmoid(h)
    recon_ref[...] = h.astype(recon_ref.dtype)


# ----------------------------------------------------------------------------
# Parameter initialization (deterministic, PyTorch nn.Linear-style uniform)
# ----------------------------------------------------------------------------
def init_linear(key, fan_in, fan_out, dtype=jnp.float32):
    kw, kb = jax.random.split(key)
    bound = 1.0 / math.sqrt(fan_in)
    w = jax.random.uniform(kw, (fan_in, fan_out), dtype, -bound, bound)
    b = jax.random.uniform(kb, (fan_out,), dtype, -bound, bound)
    return w, b


def init_vae_params(key, d, layer):
    """darray = [d] + layer ; mirrors the PyTorch module's __init__."""
    l = len(layer)
    darray = [d] + list(layer)
    keys = jax.random.split(key, (l - 1) + 2 + l)
    ki = 0
    inet = []
    for i in range(l - 1):
        inet.append(init_linear(keys[ki], darray[i], darray[i + 1])); ki += 1
    mu_p = init_linear(keys[ki], darray[l - 1], darray[l]); ki += 1
    sigma_p = init_linear(keys[ki], darray[l - 1], darray[l]); ki += 1
    gnet = []
    for i in range(l):
        gnet.append(init_linear(keys[ki], darray[l - i], darray[l - i - 1])); ki += 1
    return {"inet": inet, "mu": mu_p, "sigma": sigma_p, "gnet": gnet, "l": l}


def pack_vae_params(params):
    """Zero-pad weights/biases to (128-lane, 8-sublane)-friendly shapes and
    merge the mu/sigma heads into one (h_pad, 2*k_pad) matrix.  Done once."""
    def pad_wb(w, b):
        in_p = _rup(w.shape[0], LANE)
        out_p = _rup(w.shape[1], LANE)
        return _pad2(w, in_p, out_p), _pad2(b.reshape(1, -1), 1, out_p)

    enc = [pad_wb(w, b) for (w, b) in params["inet"]]
    dec = [pad_wb(w, b) for (w, b) in params["gnet"]]

    w_mu, b_mu = params["mu"]
    w_sg, b_sg = params["sigma"]
    in_p = _rup(w_mu.shape[0], LANE)
    k_p = _rup(w_mu.shape[1], LANE)
    head_w = jnp.concatenate([_pad2(w_mu, in_p, k_p), _pad2(w_sg, in_p, k_p)], axis=1)
    head_b = jnp.concatenate([_pad2(b_mu.reshape(1, -1), 1, k_p),
                              _pad2(b_sg.reshape(1, -1), 1, k_p)], axis=1)
    return {"enc": enc, "head_w": head_w, "head_b": head_b, "dec": dec}


# ----------------------------------------------------------------------------
# Forward pass wrapper (pad -> single fused pallas_call -> slice)
# ----------------------------------------------------------------------------
def vae_forward(packed, x, eps):
    B, d = x.shape
    L, _, k = eps.shape
    n_enc = len(packed["enc"])
    n_dec = len(packed["dec"])

    B_p = _rup(B, SUBLANE)
    d_p = _rup(d, LANE)
    k_p = _rup(k, LANE)

    x_p = jnp.pad(x, ((0, B_p - B), (0, d_p - d)))
    eps_p = jnp.pad(eps, ((0, 0), (0, B_p - B), (0, k_p - k)))

    flat_inputs = [x_p]
    for w, b in packed["enc"]:
        flat_inputs += [w, b]
    flat_inputs += [packed["head_w"], packed["head_b"], eps_p]
    for w, b in packed["dec"]:
        flat_inputs += [w, b]

    kernel = functools.partial(_vae_fused_kernel,
                               n_enc=n_enc, n_dec=n_dec, L=L, k_pad=k_p)

    vmem = lambda: pl.BlockSpec(memory_space=pltpu.MemorySpace.VMEM)
    recon_p, mu_p, logvar_p = pl.pallas_call(
        kernel,
        out_shape=(
            jax.ShapeDtypeStruct((L * B_p, d_p), x.dtype),
            jax.ShapeDtypeStruct((B_p, k_p), x.dtype),
            jax.ShapeDtypeStruct((B_p, k_p), x.dtype),
        ),
        in_specs=[vmem() for _ in flat_inputs],
        out_specs=(vmem(), vmem(), vmem()),
    )(*flat_inputs)

    recon = recon_p.reshape(L, B_p, d_p)[:, :B, :d]
    mu = mu_p[:B, :k]
    logvar = logvar_p[:B, :k]
    return recon, mu, logvar


# ----------------------------------------------------------------------------
# Pure-JAX reference (for correctness checking)
# ----------------------------------------------------------------------------
def vae_forward_ref(params, x, eps):
    h = x
    for (w, b) in params["inet"]:
        h = jax.nn.relu(h @ w + b)
    mu = h @ params["mu"][0] + params["mu"][1]
    logvar = h @ params["sigma"][0] + params["sigma"][1]
    std = jnp.exp(0.5 * logvar)
    z = eps * std[None] + mu[None]
    L, B, k = z.shape
    h = z.reshape(L * B, k)
    for (w, b) in params["gnet"][:-1]:
        h = jax.nn.relu(h @ w + b)
    w, b = params["gnet"][-1]
    recon = jax.nn.sigmoid(h @ w + b).reshape(L, B, -1)
    return recon, mu, logvar


# ----------------------------------------------------------------------------
# Demo
# ----------------------------------------------------------------------------
if __name__ == "__main__":
    # args equivalent: d=16, layer=[32, 8], L=3  (so l=2, latent dim = 8)
    d = 16
    layer = [32, 8]
    L = 3
    B = 4

    root = jax.random.PRNGKey(0)
    k_param, k_x, k_eps = jax.random.split(root, 3)

    params = init_vae_params(k_param, d, layer)
    packed = pack_vae_params(params)

    x = jax.random.uniform(k_x, (B, d), jnp.float32)
    eps = jax.random.normal(k_eps, (L, B, layer[-1]), jnp.float32)

    recon, mu, logvar = jax.jit(vae_forward)(packed, x, eps)
    jax.block_until_ready((recon, mu, logvar))

    # shape / sanity checks
    assert recon.shape == (L, B, d)
    assert mu.shape == (B, layer[-1])
    assert logvar.shape == (B, layer[-1])
    assert bool(jnp.all(jnp.isfinite(recon)))
    assert bool(jnp.all((recon >= 0.0) & (recon <= 1.0)))  # sigmoid range

    # numerical check against a pure-JAX reference
    recon_r, mu_r, logvar_r = vae_forward_ref(params, x, eps)
    assert bool(jnp.allclose(mu, mu_r, rtol=1e-4, atol=1e-4))
    assert bool(jnp.allclose(logvar, logvar_r, rtol=1e-4, atol=1e-4))
    assert bool(jnp.allclose(recon, recon_r, rtol=1e-4, atol=1e-4))

    print("KERNEL_OK")
</pallas_src>

<mosaic_0001>
module attributes {stable_mosaic.version = 11 : i64} {
  func.func @_vae_fused_kernel(%arg0: memref<8x128xf32, #tpu.memory_space<vmem>>, %arg1: memref<128x128xf32, #tpu.memory_space<vmem>>, %arg2: memref<1x128xf32, #tpu.memory_space<vmem>>, %arg3: memref<128x256xf32, #tpu.memory_space<vmem>>, %arg4: memref<1x256xf32, #tpu.memory_space<vmem>>, %arg5: memref<3x8x128xf32, #tpu.memory_space<vmem>>, %arg6: memref<128x128xf32, #tpu.memory_space<vmem>>, %arg7: memref<1x128xf32, #tpu.memory_space<vmem>>, %arg8: memref<128x128xf32, #tpu.memory_space<vmem>>, %arg9: memref<1x128xf32, #tpu.memory_space<vmem>>, %arg10: memref<24x128xf32, #tpu.memory_space<vmem>>, %arg11: memref<8x128xf32, #tpu.memory_space<vmem>>, %arg12: memref<8x128xf32, #tpu.memory_space<vmem>>) attributes {dimension_semantics = [], scalar_prefetch = 0 : i64, scratch_operands = 0 : i64, tpu.core_type = #tpu.core_type<tc>} {
    %c0 = arith.constant 0 : index
    %c0_0 = arith.constant 0 : index
    %0 = vector.load %arg0[%c0, %c0_0] : memref<8x128xf32, #tpu.memory_space<vmem>>, vector<8x128xf32>
    %c0_1 = arith.constant 0 : index
    %c0_2 = arith.constant 0 : index
    %1 = vector.load %arg1[%c0_1, %c0_2] : memref<128x128xf32, #tpu.memory_space<vmem>>, vector<128x128xf32>
    %cst = arith.constant dense<0.000000e+00> : vector<8x128xf32>
    %2 = tpu.matmul %0, %1, %cst {dimension_numbers = #tpu.dot_dimension_numbers<[1], [0], [0], [1], [0, 0, 1, 1], [], []>} : vector<8x128xf32>, vector<128x128xf32>, vector<8x128xf32> -> vector<8x128xf32>
    %c0_3 = arith.constant 0 : index
    %c0_4 = arith.constant 0 : index
    %3 = vector.load %arg2[%c0_3, %c0_4] : memref<1x128xf32, #tpu.memory_space<vmem>>, vector<1x128xf32>
    %4 = vector.broadcast %3 : vector<1x128xf32> to vector<8x128xf32>
    %5 = arith.addf %2, %4 : vector<8x128xf32>
    %cst_5 = arith.constant 0.000000e+00 : f32
    %6 = vector.broadcast %cst_5 : f32 to vector<8x128xf32>
    %7 = arith.maximumf %5, %6 : vector<8x128xf32>
    %c0_6 = arith.constant 0 : index
    %c0_7 = arith.constant 0 : index
    %8 = vector.load %arg3[%c0_6, %c0_7] : memref<128x256xf32, #tpu.memory_space<vmem>>, vector<128x256xf32>
    %cst_8 = arith.constant dense<0.000000e+00> : vector<8x256xf32>
    %9 = tpu.matmul %7, %8, %cst_8 {dimension_numbers = #tpu.dot_dimension_numbers<[1], [0], [0], [1], [0, 0, 1, 1], [], []>} : vector<8x128xf32>, vector<128x256xf32>, vector<8x256xf32> -> vector<8x256xf32>
    %c0_9 = arith.constant 0 : index
    %c0_10 = arith.constant 0 : index
    %10 = vector.load %arg4[%c0_9, %c0_10] : memref<1x256xf32, #tpu.memory_space<vmem>>, vector<1x256xf32>
    %11 = vector.broadcast %10 : vector<1x256xf32> to vector<8x256xf32>
    %12 = arith.addf %9, %11 : vector<8x256xf32>
    %13 = vector.extract_strided_slice %12 {offsets = [0, 0], sizes = [8, 128], strides = [1, 1]} : vector<8x256xf32> to vector<8x128xf32>
    %14 = vector.extract_strided_slice %12 {offsets = [0, 128], sizes = [8, 128], strides = [1, 1]} : vector<8x256xf32> to vector<8x128xf32>
    %c0_11 = arith.constant 0 : index
    %c0_12 = arith.constant 0 : index
    %15 = vector.load %arg11[%c0_11, %c0_12] : memref<8x128xf32, #tpu.memory_space<vmem>>, vector<8x128xf32>
    tpu.vector_store %arg11[%c0_11, %c0_12], %13 {strides = array<i32>} : memref<8x128xf32, #tpu.memory_space<vmem>>, vector<8x128xf32>,
    %c0_13 = arith.constant 0 : index
    %c0_14 = arith.constant 0 : index
    %16 = vector.load %arg12[%c0_13, %c0_14] : memref<8x128xf32, #tpu.memory_space<vmem>>, vector<8x128xf32>
    tpu.vector_store %arg12[%c0_13, %c0_14], %14 {strides = array<i32>} : memref<8x128xf32, #tpu.memory_space<vmem>>, vector<8x128xf32>,
    %cst_15 = arith.constant 5.000000e-01 : f32
    %17 = vector.broadcast %cst_15 : f32 to vector<8x128xf32>
    %18 = arith.mulf %17, %14 : vector<8x128xf32>
    %19 = math.exp %18 : vector<8x128xf32>
    %c0_16 = arith.constant 0 : index
    %c0_17 = arith.constant 0 : index
    %c0_18 = arith.constant 0 : index
    %20 = vector.load %arg5[%c0_16, %c0_17, %c0_18] : memref<3x8x128xf32, #tpu.memory_space<vmem>>, vector<1x8x128xf32>
    %21 = vector.shape_cast %20 : vector<1x8x128xf32> to vector<8x128xf32>
    %22 = arith.mulf %21, %19 : vector<8x128xf32>
    %23 = arith.addf %22, %13 : vector<8x128xf32>
    %c1 = arith.constant 1 : index
    %c0_19 = arith.constant 0 : index
    %c0_20 = arith.constant 0 : index
    %24 = vector.load %arg5[%c1, %c0_19, %c0_20] : memref<3x8x128xf32, #tpu.memory_space<vmem>>, vector<1x8x128xf32>
    %25 = vector.shape_cast %24 : vector<1x8x128xf32> to vector<8x128xf32>
    %26 = arith.mulf %25, %19 : vector<8x128xf32>
    %27 = arith.addf %26, %13 : vector<8x128xf32>
    %c2 = arith.constant 2 : index
    %c0_21 = arith.constant 0 : index
    %c0_22 = arith.constant 0 : index
    %28 = vector.load %arg5[%c2, %c0_21, %c0_22] : memref<3x8x128xf32, #tpu.memory_space<vmem>>, vector<1x8x128xf32>
    %29 = vector.shape_cast %28 : vector<1x8x128xf32> to vector<8x128xf32>
    %30 = arith.mulf %29, %19 : vector<8x128xf32>
    %31 = arith.addf %30, %13 : vector<8x128xf32>
    %32 = tpu.concatenate %23, %27, %31 in 0 : vector<8x128xf32>, vector<8x128xf32>, vector<8x128xf32> -> vector<24x128xf32>
    %c0_23 = arith.constant 0 : index
    %c0_24 = arith.constant 0 : index
    %33 = vector.load %arg6[%c0_23, %c0_24] : memref<128x128xf32, #tpu.memory_space<vmem>>, vector<128x128xf32>
    %cst_25 = arith.constant dense<0.000000e+00> : vector<24x128xf32>
    %34 = tpu.matmul %32, %33, %cst_25 {dimension_numbers = #tpu.dot_dimension_numbers<[1], [0], [0], [1], [0, 0, 1, 1], [], []>} : vector<24x128xf32>, vector<128x128xf32>, vector<24x128xf32> -> vector<24x128xf32>
    %c0_26 = arith.constant 0 : index
    %c0_27 = arith.constant 0 : index
    %35 = vector.load %arg7[%c0_26, %c0_27] : memref<1x128xf32, #tpu.memory_space<vmem>>, vector<1x128xf32>
    %36 = vector.broadcast %35 : vector<1x128xf32> to vector<24x128xf32>
    %37 = arith.addf %34, %36 : vector<24x128xf32>
    %cst_28 = arith.constant 0.000000e+00 : f32
    %38 = vector.broadcast %cst_28 : f32 to vector<24x128xf32>
    %39 = arith.maximumf %37, %38 : vector<24x128xf32>
    %c0_29 = arith.constant 0 : index
    %c0_30 = arith.constant 0 : index
    %40 = vector.load %arg8[%c0_29, %c0_30] : memref<128x128xf32, #tpu.memory_space<vmem>>, vector<128x128xf32>
    %cst_31 = arith.constant dense<0.000000e+00> : vector<24x128xf32>
    %41 = tpu.matmul %39, %40, %cst_31 {dimension_numbers = #tpu.dot_dimension_numbers<[1], [0], [0], [1], [0, 0, 1, 1], [], []>} : vector<24x128xf32>, vector<128x128xf32>, vector<24x128xf32> -> vector<24x128xf32>
    %c0_32 = arith.constant 0 : index
    %c0_33 = arith.constant 0 : index
    %42 = vector.load %arg9[%c0_32, %c0_33] : memref<1x128xf32, #tpu.memory_space<vmem>>, vector<1x128xf32>
    %43 = vector.broadcast %42 : vector<1x128xf32> to vector<24x128xf32>
    %44 = arith.addf %41, %43 : vector<24x128xf32>
    %45 = arith.negf %44 : vector<24x128xf32>
    %46 = math.exp %45 : vector<24x128xf32>
    %cst_34 = arith.constant 1.000000e+00 : f32
    %47 = vector.broadcast %cst_34 : f32 to vector<24x128xf32>
    %48 = arith.addf %47, %46 : vector<24x128xf32>
    %49 = arith.divf %47, %48 : vector<24x128xf32>
    %c0_35 = arith.constant 0 : index
    %c0_36 = arith.constant 0 : index
    %50 = vector.load %arg10[%c0_35, %c0_36] : memref<24x128xf32, #tpu.memory_space<vmem>>, vector<24x128xf32>
    tpu.vector_store %arg10[%c0_35, %c0_36], %49 {strides = array<i32>} : memref<24x128xf32, #tpu.memory_space<vmem>>, vector<24x128xf32>,
    return
  }
}

</mosaic_0001>

<llo_original>
// kernel: vae_forward.1
$region0: #{vae_forward.1}
  #allocation0 [shape = 'u32[]', space=smem, size = 0x4, offset = 0x4, fixed_abs, tag = 'smem constant byte address 0x4 - core index']
  #allocation1 [shape = 'u32[144,128]{1,0:T(1,128)}', space=vmem, size = 0x12000, scoped, tag = 'internal scratch']
  %s0 = inlined_call_operand.vmem [shape: f32[8,128], index: 0, kind: input, shape index: {}]
  %s1 = inlined_call_operand.hbm [shape: f32[128,128], index: 1, kind: input, shape index: {}]
  %s2 = inlined_call_operand.vmem [shape: f32[1,128], index: 2, kind: input, shape index: {}]
  %s3 = inlined_call_operand.hbm [shape: f32[128,256], index: 3, kind: input, shape index: {}]
  %s4 = inlined_call_operand.vmem [shape: f32[1,256], index: 4, kind: input, shape index: {}]
  %s5 = inlined_call_operand.vmem [shape: f32[3,8,128], index: 5, kind: input, shape index: {}]
  %s6 = inlined_call_operand.hbm [shape: f32[128,128], index: 6, kind: input, shape index: {}]
  %s7 = inlined_call_operand.vmem [shape: f32[1,128], index: 7, kind: input, shape index: {}]
  %s8 = inlined_call_operand.hbm [shape: f32[128,128], index: 8, kind: input, shape index: {}]
  %s9 = inlined_call_operand.vmem [shape: f32[1,128], index: 9, kind: input, shape index: {}]
  %s10 = inlined_call_operand.vmem [shape: f32[24,128], index: 10, kind: output, shape index: {0}]
  %s11 = inlined_call_operand.vmem [shape: f32[8,128], index: 11, kind: output, shape index: {1}]
  %s12 = inlined_call_operand.vmem [shape: f32[8,128], index: 12, kind: output, shape index: {2}]
  %13 = xla_tuple %s10, %s11, %s12
  %s14 = sld [smem:[#allocation0]]
  $region82: #{vae_forward.1} parent=0
    _
  %s16 = ssub.s32 1, %s14
  %s17 = scalar_select 0, %s16, %s14
  $region1: #{vae_forward.1} parent=0
    #allocation2 [shape = 'u8[65536]{0}', space=vmem, size = 0x10000, scoped, tag = 'input window, operand 1, single buffered']
    #allocation3 [shape = 's32[1]{0}', space=sflag, size = 0x4, scoped, tag = 'scoped memory for vae_forward.1']
    #allocation4 [shape = 'u8[131072]{0}', space=vmem, size = 0x20000, scoped, tag = 'input window, operand 3, single buffered']
    #allocation5 [shape = 's32[1]{0}', space=sflag, size = 0x4, scoped, tag = 'scoped memory for vae_forward.1']
    #allocation6 [shape = 'u8[65536]{0}', space=vmem, size = 0x10000, scoped, tag = 'input window, operand 6, single buffered']
    #allocation7 [shape = 'u8[65536]{0}', space=vmem, size = 0x10000, scoped, tag = 'input window, operand 8, single buffered']
    #allocation8 [shape = 's32[1]{0}', space=sflag, size = 0x4, scoped, tag = 'scoped memory for vae_forward.1']
    %18 = vsyncpa [#allocation3], 0
    %19 = vsyncpa [#allocation5], 0
    %20 = vsyncpa [#allocation8], 0
    // Predicated region
    $region2: #{vae_forward.1} parent=1 // pred_check
      _
    $region3: #{vae_forward.1} parent=1 // pred_check_branch
      %22 = sbr.rel (0) target = $region5
    $region4: #{vae_forward.1} parent=1 // pred_region
      _
    $region5: #{vae_forward.1} parent=1 // pred_fallthru
      _
    // Predicated region
    $region6: #{vae_forward.1} parent=1 // pred_check
      _
    $region7: #{vae_forward.1} parent=1 // pred_check_branch
      %24 = sbr.rel (0) target = $region9
    $region8: #{vae_forward.1} parent=1 // pred_region
      %s26 = ssub.s32 2048, 2048
      %27 = vsyncadd [#allocation3], %s26
      %s28 = sshll.u32 [#allocation2], 4
      %s29 = int_to_ptr.vmem [resolvable:$true] %s28
      %34 = dma.hbm_to_vmem [thread:$0]  %s1, 2048, %s29, [#allocation3], 128, 128, 8
    $region9: #{vae_forward.1} parent=1 // pred_fallthru
      _
    // Predicated region
    $region10: #{vae_forward.1} parent=1 // pred_check
      _
    $region11: #{vae_forward.1} parent=1 // pred_check_branch
      %36 = sbr.rel (0) target = $region13
    $region12: #{vae_forward.1} parent=1 // pred_region
      _
    $region13: #{vae_forward.1} parent=1 // pred_fallthru
      _
    // Predicated region
    $region14: #{vae_forward.1} parent=1 // pred_check
      _
    $region15: #{vae_forward.1} parent=1 // pred_check_branch
      %38 = sbr.rel (0) target = $region17
    $region16: #{vae_forward.1} parent=1 // pred_region
      %s40 = ssub.s32 4096, 4096
      %41 = vsyncadd [#allocation5], %s40
      %s42 = sshll.u32 [#allocation4], 4
      %s43 = int_to_ptr.vmem [resolvable:$true] %s42
      %48 = dma.hbm_to_vmem [thread:$0]  %s3, 4096, %s43, [#allocation5], 256, 256, 16
    $region17: #{vae_forward.1} parent=1 // pred_fallthru
      _
    // Predicated region
    $region18: #{vae_forward.1} parent=1 // pred_check
      _
    $region19: #{vae_forward.1} parent=1 // pred_check_branch
      %50 = sbr.rel (0) target = $region21
    $region20: #{vae_forward.1} parent=1 // pred_region
      _
    $region21: #{vae_forward.1} parent=1 // pred_fallthru
      _
    // Predicated region
    $region22: #{vae_forward.1} parent=1 // pred_check
      _
    $region23: #{vae_forward.1} parent=1 // pred_check_branch
      %52 = sbr.rel (0) target = $region25
    $region24: #{vae_forward.1} parent=1 // pred_region
      _
    $region25: #{vae_forward.1} parent=1 // pred_fallthru
      _
    // Predicated region
    $region26: #{vae_forward.1} parent=1 // pred_check
      _
    $region27: #{vae_forward.1} parent=1 // pred_check_branch
      %54 = sbr.rel (0) target = $region29
    $region28: #{vae_forward.1} parent=1 // pred_region
      %s56 = ssub.s32 2048, 2048
      %57 = vsyncadd [#allocation5], %s56
      %s58 = sshll.u32 [#allocation6], 4
      %s59 = int_to_ptr.vmem [resolvable:$true] %s58
      %64 = dma.hbm_to_vmem [thread:$0]  %s6, 2048, %s59, [#allocation5], 128, 128, 8
    $region29: #{vae_forward.1} parent=1 // pred_fallthru
      _
    // Predicated region
    $region30: #{vae_forward.1} parent=1 // pred_check
      _
    $region31: #{vae_forward.1} parent=1 // pred_check_branch
      %66 = sbr.rel (0) target = $region33
    $region32: #{vae_forward.1} parent=1 // pred_region
      _
    $region33: #{vae_forward.1} parent=1 // pred_fallthru
      _
    // Predicated region
    $region34: #{vae_forward.1} parent=1 // pred_check
      _
    $region35: #{vae_forward.1} parent=1 // pred_check_branch
      %68 = sbr.rel (0) target = $region37
    $region36: #{vae_forward.1} parent=1 // pred_region
      %s70 = ssub.s32 2048, 2048
      %71 = vsyncadd [#allocation8], %s70
      %s72 = sshll.u32 [#allocation7], 4
      %s73 = int_to_ptr.vmem [resolvable:$true] %s72
      %78 = dma.hbm_to_vmem [thread:$0]  %s8, 2048, %s73, [#allocation8], 128, 128, 8
    $region37: #{vae_forward.1} parent=1 // pred_fallthru
      _
    // Predicated region
    $region38: #{vae_forward.1} parent=1 // pred_check
      _
    $region39: #{vae_forward.1} parent=1 // pred_check_branch
      %80 = sbr.rel (0) target = $region41
    $region40: #{vae_forward.1} parent=1 // pred_region
      _
    $region41: #{vae_forward.1} parent=1 // pred_fallthru
      _
    // Predicated region
    $region42: #{vae_forward.1} parent=1 // pred_check
      _
    $region43: #{vae_forward.1} parent=1 // pred_check_branch
      %82 = sbr.rel (0) target = $region45
    $region44: #{vae_forward.1} parent=1 // pred_region
      %83 = dma.done [#allocation3], 2048
    $region45: #{vae_forward.1} parent=1 // pred_fallthru
      _
    // Predicated region
    $region46: #{vae_forward.1} parent=1 // pred_check
      _
    $region47: #{vae_forward.1} parent=1 // pred_check_branch
      %85 = sbr.rel (0) target = $region49
    $region48: #{vae_forward.1} parent=1 // pred_region
      %86 = dma.done [#allocation5], 4096
    $region49: #{vae_forward.1} parent=1 // pred_fallthru
      _
    // Predicated region
    $region50: #{vae_forward.1} parent=1 // pred_check
      _
    $region51: #{vae_forward.1} parent=1 // pred_check_branch
      %88 = sbr.rel (0) target = $region53
    $region52: #{vae_forward.1} parent=1 // pred_region
      %89 = dma.done [#allocation5], 2048
    $region53: #{vae_forward.1} parent=1 // pred_fallthru
      _
    // Predicated region
    $region54: #{vae_forward.1} parent=1 // pred_check
      _
    $region55: #{vae_forward.1} parent=1 // pred_check_branch
      %91 = sbr.rel (0) target = $region57
    $region56: #{vae_forward.1} parent=1 // pred_region
      %92 = dma.done [#allocation8], 2048
    $region57: #{vae_forward.1} parent=1 // pred_fallthru
      _
    %v93 = vld [vmem:[%s0] sm:$0xff]
    %v94 = vld [vmem:[#allocation2] sm:$0xff]
    %v95 = vld [vmem:[#allocation2 + $0x8] sm:$0xff]
    %v96 = vld [vmem:[#allocation2 + $0x10] sm:$0xff]
    %v97 = vld [vmem:[#allocation2 + $0x18] sm:$0xff]
    %v98 = vld [vmem:[#allocation2 + $0x20] sm:$0xff]
    %v99 = vld [vmem:[#allocation2 + $0x28] sm:$0xff]
    %v100 = vld [vmem:[#allocation2 + $0x30] sm:$0xff]
    %v101 = vld [vmem:[#allocation2 + $0x38] sm:$0xff]
    %v102 = vld [vmem:[#allocation2 + $0x40] sm:$0xff]
    %v103 = vld [vmem:[#allocation2 + $0x48] sm:$0xff]
    %v104 = vld [vmem:[#allocation2 + $0x50] sm:$0xff]
    %v105 = vld [vmem:[#allocation2 + $0x58] sm:$0xff]
    %v106 = vld [vmem:[#allocation2 + $0x60] sm:$0xff]
    %v107 = vld [vmem:[#allocation2 + $0x68] sm:$0xff]
    %v108 = vld [vmem:[#allocation2 + $0x70] sm:$0xff]
    %v109 = vld [vmem:[#allocation2 + $0x78] sm:$0xff]
    %v110 = vld [vmem:[%s2] sm:$0x1]
    %v112 = vlaneseq
    %v113 = vshrl.u32 %v112, 7
    %v114 = vsub.s32 0, %v113
    %v115 = vrot.slane %v110, %v114
    %117 = vmatprep.subr.mxu0 0.0
    %118 = vmatpush1.msra.mxu0 %v109
    %119 = vmatprep.subr.mxu0 0.0
    %120 = vmatpush1.msra.mxu0 %v108
    %121 = vmatprep.subr.mxu0 0.0
    %122 = vmatpush1.msra.mxu0 %v107
    %123 = vmatprep.subr.mxu0 0.0
    %124 = vmatpush1.msra.mxu0 %v106
    %125 = vmatprep.subr.mxu0 0.0
    %126 = vmatpush1.msra.mxu0 %v105
    %127 = vmatprep.subr.mxu0 0.0
    %128 = vmatpush1.msra.mxu0 %v104
    %129 = vmatprep.subr.mxu0 0.0
    %130 = vmatpush1.msra.mxu0 %v103
    %131 = vmatprep.subr.mxu0 0.0
    %132 = vmatpush1.msra.mxu0 %v102
    %133 = vmatprep.subr.mxu0 0.0
    %134 = vmatpush1.msra.mxu0 %v101
    %135 = vmatprep.subr.mxu0 0.0
    %136 = vmatpush1.msra.mxu0 %v100
    %137 = vmatprep.subr.mxu0 0.0
    %138 = vmatpush1.msra.mxu0 %v99
    %139 = vmatprep.subr.mxu0 0.0
    %140 = vmatpush1.msra.mxu0 %v98
    %141 = vmatprep.subr.mxu0 0.0
    %142 = vmatpush1.msra.mxu0 %v97
    %143 = vmatprep.subr.mxu0 0.0
    %144 = vmatpush1.msra.mxu0 %v96
    %145 = vmatprep.subr.mxu0 0.0
    %146 = vmatpush1.msra.mxu0 %v95
    %147 = vmatprep.subr.mxu0 0.0
    %148 = vmatpush1.msra.mxu0 %v94
    %149 = vmatprep.subr.mxu0 0.0
    %150 = vmatpush2.msra.mxu0 0.0
    %151 = vmatprep.subr.mxu0 0.0
    %152 = vmatpush2.msra.mxu0 0.0
    %153 = vmatprep.subr.mxu0 0.0
    %154 = vmatpush2.msra.mxu0 0.0
    %155 = vmatprep.subr.mxu0 0.0
    %156 = vmatpush2.msra.mxu0 0.0
    %157 = vmatprep.subr.mxu0 0.0
    %158 = vmatpush2.msra.mxu0 0.0
    %159 = vmatprep.subr.mxu0 0.0
    %160 = vmatpush2.msra.mxu0 0.0
    %161 = vmatprep.subr.mxu0 0.0
    %162 = vmatpush2.msra.mxu0 0.0
    %163 = vmatprep.subr.mxu0 0.0
    %164 = vmatpush2.msra.mxu0 0.0
    %165 = vmatprep.subr.mxu0 0.0
    %166 = vmatpush2.msra.mxu0 0.0
    %167 = vmatprep.subr.mxu0 0.0
    %168 = vmatpush2.msra.mxu0 0.0
    %169 = vmatprep.subr.mxu0 0.0
    %170 = vmatpush2.msra.mxu0 0.0
    %171 = vmatprep.subr.mxu0 0.0
    %172 = vmatpush2.msra.mxu0 0.0
    %173 = vmatprep.subr.mxu0 0.0
    %174 = vmatpush2.msra.mxu0 0.0
    %175 = vmatprep.subr.mxu0 0.0
    %176 = vmatpush2.msra.mxu0 0.0
    %177 = vmatprep.subr.mxu0 0.0
    %178 = vmatpush2.msra.mxu0 0.0
    %179 = vmatprep.subr.mxu0 0.0
    %180 = vmatpush2.msra.mxu0 0.0
    %181 = vmatprep.mubr.f32.mxu0 0.0
    %182 = vmatmul.mubr.f32.gmra.mxu0 %v93
    %v183 = vpop.f32.mrf.mxu0
    %v184 = vadd.f32 %v115, %v183
    %v185 = vpop.f32.mrf.mxu0
    %186 = vdwg.mxu0
    %v187 = vmax.f32 %v184, 0.0
    %v188 = vld [vmem:[#allocation4] sm:$0xff]
    %v189 = vld [vmem:[#allocation4 + $0x8] sm:$0xff]
    %v190 = vld [vmem:[#allocation4 + $0x10] sm:$0xff]
    %v191 = vld [vmem:[#allocation4 + $0x18] sm:$0xff]
    %v192 = vld [vmem:[#allocation4 + $0x20] sm:$0xff]
    %v193 = vld [vmem:[#allocation4 + $0x28] sm:$0xff]
    %v194 = vld [vmem:[#allocation4 + $0x30] sm:$0xff]
    %v195 = vld [vmem:[#allocation4 + $0x38] sm:$0xff]
    %v196 = vld [vmem:[#allocation4 + $0x40] sm:$0xff]
    %v197 = vld [vmem:[#allocation4 + $0x48] sm:$0xff]
    %v198 = vld [vmem:[#allocation4 + $0x50] sm:$0xff]
    %v199 = vld [vmem:[#allocation4 + $0x58] sm:$0xff]
    %v200 = vld [vmem:[#allocation4 + $0x60] sm:$0xff]
    %v201 = vld [vmem:[#allocation4 + $0x68] sm:$0xff]
    %v202 = vld [vmem:[#allocation4 + $0x70] sm:$0xff]
    %v203 = vld [vmem:[#allocation4 + $0x78] sm:$0xff]
    %v204 = vld [vmem:[#allocation4 + $0x80] sm:$0xff]
    %v205 = vld [vmem:[#allocation4 + $0x88] sm:$0xff]
    %v206 = vld [vmem:[#allocation4 + $0x90] sm:$0xff]
    %v207 = vld [vmem:[#allocation4 + $0x98] sm:$0xff]
    %v208 = vld [vmem:[#allocation4 + $0xa0] sm:$0xff]
    %v209 = vld [vmem:[#allocation4 + $0xa8] sm:$0xff]
    %v210 = vld [vmem:[#allocation4 + $0xb0] sm:$0xff]
    %v211 = vld [vmem:[#allocation4 + $0xb8] sm:$0xff]
    %v212 = vld [vmem:[#allocation4 + $0xc0] sm:$0xff]
    %v213 = vld [vmem:[#allocation4 + $0xc8] sm:$0xff]
    %v214 = vld [vmem:[#allocation4 + $0xd0] sm:$0xff]
    %v215 = vld [vmem:[#allocation4 + $0xd8] sm:$0xff]
    %v216 = vld [vmem:[#allocation4 + $0xe0] sm:$0xff]
    %v217 = vld [vmem:[#allocation4 + $0xe8] sm:$0xff]
    %v218 = vld [vmem:[#allocation4 + $0xf0] sm:$0xff]
    %v219 = vld [vmem:[#allocation4 + $0xf8] sm:$0xff]
    %v220 = vld [vmem:[%s4] sm:$0x3]
    %v222 = vlaneseq
    %v223 = vshrl.u32 %v222, 7
    %v224 = vsub.s32 0, %v223
    %v225 = vrot.slane %v220, %v224
    %v226 = vlaneseq
    %v227 = vshrl.u32 %v226, 7
    %v228 = vsub.s32 1, %v227
    %v229 = vrot.slane %v220, %v228
    %232 = vmatprep.subr.mxu0 %v219
    %233 = vmatpush1.msra.mxu0 %v218
    %234 = vmatprep.subr.mxu0 %v217
    %235 = vmatpush1.msra.mxu0 %v216
    %236 = vmatprep.subr.mxu0 %v215
    %237 = vmatpush1.msra.mxu0 %v214
    %238 = vmatprep.subr.mxu0 %v213
    %239 = vmatpush1.msra.mxu0 %v212
    %240 = vmatprep.subr.mxu0 %v211
    %241 = vmatpush1.msra.mxu0 %v210
    %242 = vmatprep.subr.mxu0 %v209
    %243 = vmatpush1.msra.mxu0 %v208
    %244 = vmatprep.subr.mxu0 %v207
    %245 = vmatpush1.msra.mxu0 %v206
    %246 = vmatprep.subr.mxu0 %v205
    %247 = vmatpush1.msra.mxu0 %v204
    %248 = vmatprep.subr.mxu0 %v203
    %249 = vmatpush1.msra.mxu0 %v202
    %250 = vmatprep.subr.mxu0 %v201
    %251 = vmatpush1.msra.mxu0 %v200
    %252 = vmatprep.subr.mxu0 %v199
    %253 = vmatpush1.msra.mxu0 %v198
    %254 = vmatprep.subr.mxu0 %v197
    %255 = vmatpush1.msra.mxu0 %v196
    %256 = vmatprep.subr.mxu0 %v195
    %257 = vmatpush1.msra.mxu0 %v194
    %258 = vmatprep.subr.mxu0 %v193
    %259 = vmatpush1.msra.mxu0 %v192
    %260 = vmatprep.subr.mxu0 %v191
    %261 = vmatpush1.msra.mxu0 %v190
    %262 = vmatprep.subr.mxu0 %v189
    %263 = vmatpush1.msra.mxu0 %v188
    %264 = vmatprep.subr.mxu0 0.0
    %265 = vmatpush2.msra.mxu0 0.0
    %266 = vmatprep.subr.mxu0 0.0
    %267 = vmatpush2.msra.mxu0 0.0
    %268 = vmatprep.subr.mxu0 0.0
    %269 = vmatpush2.msra.mxu0 0.0
    %270 = vmatprep.subr.mxu0 0.0
    %271 = vmatpush2.msra.mxu0 0.0
    %272 = vmatprep.subr.mxu0 0.0
    %273 = vmatpush2.msra.mxu0 0.0
    %274 = vmatprep.subr.mxu0 0.0
    %275 = vmatpush2.msra.mxu0 0.0
    %276 = vmatprep.subr.mxu0 0.0
    %277 = vmatpush2.msra.mxu0 0.0
    %278 = vmatprep.subr.mxu0 0.0
    %279 = vmatpush2.msra.mxu0 0.0
    %280 = vmatprep.subr.mxu0 0.0
    %281 = vmatpush2.msra.mxu0 0.0
    %282 = vmatprep.subr.mxu0 0.0
    %283 = vmatpush2.msra.mxu0 0.0
    %284 = vmatprep.subr.mxu0 0.0
    %285 = vmatpush2.msra.mxu0 0.0
    %286 = vmatprep.subr.mxu0 0.0
    %287 = vmatpush2.msra.mxu0 0.0
    %288 = vmatprep.subr.mxu0 0.0
    %289 = vmatpush2.msra.mxu0 0.0
    %290 = vmatprep.subr.mxu0 0.0
    %291 = vmatpush2.msra.mxu0 0.0
    %292 = vmatprep.subr.mxu0 0.0
    %293 = vmatpush2.msra.mxu0 0.0
    %294 = vmatprep.subr.mxu0 0.0
    %295 = vmatpush2.msra.mxu0 0.0
    %296 = vmatprep.mubr.f32.mxu0 0.0
    %297 = vmatmul.mubr.f32.gmra.mxu0 %v187
    %v298 = vpop.f32.mrf.mxu0
    %v299 = vadd.f32 %v225, %v298
    %v300 = vpop.f32.mrf.mxu0
    %v301 = vadd.f32 %v229, %v300
    %302 = vdwg.mxu0
    %303 = vst [vmem:[%s11] sm:$0xff] %v299
    %304 = vst [vmem:[%s12] sm:$0xff] %v301
    %v305 = vmul.f32 %v301, 0.5
    %v306 = vmul.f32 %v305, 1.442695
    %v307 = vpow.pop %v306
    %v308 = vld [vmem:[%s5] sm:$0xff]
    %v309 = vmul.f32 %v308, %v307
    %v310 = vadd.f32 %v309, %v299
    %s311 = scalar_lea.vmem %s5, 8
    %v312 = vld [vmem:[%s311] sm:$0xff]
    %v313 = vmul.f32 %v312, %v307
    %v314 = vadd.f32 %v313, %v299
    %s315 = scalar_lea.vmem %s5, 16
    %v316 = vld [vmem:[%s315] sm:$0xff]
    %v317 = vmul.f32 %v316, %v307
    %v318 = vadd.f32 %v317, %v299
    %v319 = vld [vmem:[#allocation6] sm:$0xff]
    %v320 = vld [vmem:[#allocation6 + $0x8] sm:$0xff]
    %v321 = vld [vmem:[#allocation6 + $0x10] sm:$0xff]
    %v322 = vld [vmem:[#allocation6 + $0x18] sm:$0xff]
    %v323 = vld [vmem:[#allocation6 + $0x20] sm:$0xff]
    %v324 = vld [vmem:[#allocation6 + $0x28] sm:$0xff]
    %v325 = vld [vmem:[#allocation6 + $0x30] sm:$0xff]
    %v326 = vld [vmem:[#allocation6 + $0x38] sm:$0xff]
    %v327 = vld [vmem:[#allocation6 + $0x40] sm:$0xff]
    %v328 = vld [vmem:[#allocation6 + $0x48] sm:$0xff]
    %v329 = vld [vmem:[#allocation6 + $0x50] sm:$0xff]
    %v330 = vld [vmem:[#allocation6 + $0x58] sm:$0xff]
    %v331 = vld [vmem:[#allocation6 + $0x60] sm:$0xff]
    %v332 = vld [vmem:[#allocation6 + $0x68] sm:$0xff]
    %v333 = vld [vmem:[#allocation6 + $0x70] sm:$0xff]
    %v334 = vld [vmem:[#allocation6 + $0x78] sm:$0xff]
    %v335 = vld [vmem:[%s7] sm:$0x1]
    %v337 = vlaneseq
    %v338 = vshrl.u32 %v337, 7
    %v339 = vsub.s32 0, %v338
    %v340 = vrot.slane %v335, %v339
    %342 = vmatprep.subr.mxu0 0.0
    %343 = vmatpush1.msra.mxu0 %v334
    %344 = vmatprep.subr.mxu0 0.0
    %345 = vmatpush1.msra.mxu0 %v333
    %346 = vmatprep.subr.mxu0 0.0
    %347 = vmatpush1.msra.mxu0 %v332
    %348 = vmatprep.subr.mxu0 0.0
    %349 = vmatpush1.msra.mxu0 %v331
    %350 = vmatprep.subr.mxu0 0.0
    %351 = vmatpush1.msra.mxu0 %v330
    %352 = vmatprep.subr.mxu0 0.0
    %353 = vmatpush1.msra.mxu0 %v329
    %354 = vmatprep.subr.mxu0 0.0
    %355 = vmatpush1.msra.mxu0 %v328
    %356 = vmatprep.subr.mxu0 0.0
    %357 = vmatpush1.msra.mxu0 %v327
    %358 = vmatprep.subr.mxu0 0.0
    %359 = vmatpush1.msra.mxu0 %v326
    %360 = vmatprep.subr.mxu0 0.0
    %361 = vmatpush1.msra.mxu0 %v325
    %362 = vmatprep.subr.mxu0 0.0
    %363 = vmatpush1.msra.mxu0 %v324
    %364 = vmatprep.subr.mxu0 0.0
    %365 = vmatpush1.msra.mxu0 %v323
    %366 = vmatprep.subr.mxu0 0.0
    %367 = vmatpush1.msra.mxu0 %v322
    %368 = vmatprep.subr.mxu0 0.0
    %369 = vmatpush1.msra.mxu0 %v321
    %370 = vmatprep.subr.mxu0 0.0
    %371 = vmatpush1.msra.mxu0 %v320
    %372 = vmatprep.subr.mxu0 0.0
    %373 = vmatpush1.msra.mxu0 %v319
    %374 = vmatprep.subr.mxu0 0.0
    %375 = vmatpush2.msra.mxu0 0.0
    %376 = vmatprep.subr.mxu0 0.0
    %377 = vmatpush2.msra.mxu0 0.0
    %378 = vmatprep.subr.mxu0 0.0
    %379 = vmatpush2.msra.mxu0 0.0
    %380 = vmatprep.subr.mxu0 0.0
    %381 = vmatpush2.msra.mxu0 0.0
    %382 = vmatprep.subr.mxu0 0.0
    %383 = vmatpush2.msra.mxu0 0.0
    %384 = vmatprep.subr.mxu0 0.0
    %385 = vmatpush2.msra.mxu0 0.0
    %386 = vmatprep.subr.mxu0 0.0
    %387 = vmatpush2.msra.mxu0 0.0
    %388 = vmatprep.subr.mxu0 0.0
    %389 = vmatpush2.msra.mxu0 0.0
    %390 = vmatprep.subr.mxu0 0.0
    %391 = vmatpush2.msra.mxu0 0.0
    %392 = vmatprep.subr.mxu0 0.0
    %393 = vmatpush2.msra.mxu0 0.0
    %394 = vmatprep.subr.mxu0 0.0
    %395 = vmatpush2.msra.mxu0 0.0
    %396 = vmatprep.subr.mxu0 0.0
    %397 = vmatpush2.msra.mxu0 0.0
    %398 = vmatprep.subr.mxu0 0.0
    %399 = vmatpush2.msra.mxu0 0.0
    %400 = vmatprep.subr.mxu0 0.0
    %401 = vmatpush2.msra.mxu0 0.0
    %402 = vmatprep.subr.mxu0 0.0
    %403 = vmatpush2.msra.mxu0 0.0
    %404 = vmatprep.subr.mxu0 0.0
    %405 = vmatpush2.msra.mxu0 0.0
    %406 = vmatprep.mubr.f32.mxu0 0.0
    %407 = vmatmul.mubr.f32.gmra.mxu0 %v310
    %v408 = vpop.f32.mrf.mxu0
    %v409 = vadd.f32 %v340, %v408
    %v410 = vpop.f32.mrf.mxu0
    %411 = vmatprep.mubr.f32.mxu0 0.0
    %412 = vmatmul.mubr.f32.gmra.mxu0 %v314
    %v413 = vpop.f32.mrf.mxu0
    %v414 = vadd.f32 %v340, %v413
    %v415 = vpop.f32.mrf.mxu0
    %416 = vmatprep.mubr.f32.mxu0 0.0
    %417 = vmatmul.mubr.f32.gmra.mxu0 %v318
    %v418 = vpop.f32.mrf.mxu0
    %v419 = vadd.f32 %v340, %v418
    %v420 = vpop.f32.mrf.mxu0
    %421 = vdwg.mxu0
    %v422 = vmax.f32 %v409, 0.0
    %v423 = vmax.f32 %v414, 0.0
    %v424 = vmax.f32 %v419, 0.0
    %v425 = vld [vmem:[#allocation7] sm:$0xff]
    %v426 = vld [vmem:[#allocation7 + $0x8] sm:$0xff]
    %v427 = vld [vmem:[#allocation7 + $0x10] sm:$0xff]
    %v428 = vld [vmem:[#allocation7 + $0x18] sm:$0xff]
    %v429 = vld [vmem:[#allocation7 + $0x20] sm:$0xff]
    %v430 = vld [vmem:[#allocation7 + $0x28] sm:$0xff]
    %v431 = vld [vmem:[#allocation7 + $0x30] sm:$0xff]
    %v432 = vld [vmem:[#allocation7 + $0x38] sm:$0xff]
    %v433 = vld [vmem:[#allocation7 + $0x40] sm:$0xff]
    %v434 = vld [vmem:[#allocation7 + $0x48] sm:$0xff]
    %v435 = vld [vmem:[#allocation7 + $0x50] sm:$0xff]
    %v436 = vld [vmem:[#allocation7 + $0x58] sm:$0xff]
    %v437 = vld [vmem:[#allocation7 + $0x60] sm:$0xff]
    %v438 = vld [vmem:[#allocation7 + $0x68] sm:$0xff]
    %v439 = vld [vmem:[#allocation7 + $0x70] sm:$0xff]
    %v440 = vld [vmem:[#allocation7 + $0x78] sm:$0xff]
    %v441 = vld [vmem:[%s9] sm:$0x1]
    %v443 = vlaneseq
    %v444 = vshrl.u32 %v443, 7
    %v445 = vsub.s32 0, %v444
    %v446 = vrot.slane %v441, %v445
    %448 = vmatprep.subr.mxu0 0.0
    %449 = vmatpush1.msra.mxu0 %v440
    %450 = vmatprep.subr.mxu0 0.0
    %451 = vmatpush1.msra.mxu0 %v439
    %452 = vmatprep.subr.mxu0 0.0
    %453 = vmatpush1.msra.mxu0 %v438
    %454 = vmatprep.subr.mxu0 0.0
    %455 = vmatpush1.msra.mxu0 %v437
    %456 = vmatprep.subr.mxu0 0.0
    %457 = vmatpush1.msra.mxu0 %v436
    %458 = vmatprep.subr.mxu0 0.0
    %459 = vmatpush1.msra.mxu0 %v435
    %460 = vmatprep.subr.mxu0 0.0
    %461 = vmatpush1.msra.mxu0 %v434
    %462 = vmatprep.subr.mxu0 0.0
    %463 = vmatpush1.msra.mxu0 %v433
    %464 = vmatprep.subr.mxu0 0.0
    %465 = vmatpush1.msra.mxu0 %v432
    %466 = vmatprep.subr.mxu0 0.0
    %467 = vmatpush1.msra.mxu0 %v431
    %468 = vmatprep.subr.mxu0 0.0
    %469 = vmatpush1.msra.mxu0 %v430
    %470 = vmatprep.subr.mxu0 0.0
    %471 = vmatpush1.msra.mxu0 %v429
    %472 = vmatprep.subr.mxu0 0.0
    %473 = vmatpush1.msra.mxu0 %v428
    %474 = vmatprep.subr.mxu0 0.0
    %475 = vmatpush1.msra.mxu0 %v427
    %476 = vmatprep.subr.mxu0 0.0
    %477 = vmatpush1.msra.mxu0 %v426
    %478 = vmatprep.subr.mxu0 0.0
    %479 = vmatpush1.msra.mxu0 %v425
    %480 = vmatprep.subr.mxu0 0.0
    %481 = vmatpush2.msra.mxu0 0.0
    %482 = vmatprep.subr.mxu0 0.0
    %483 = vmatpush2.msra.mxu0 0.0
    %484 = vmatprep.subr.mxu0 0.0
    %485 = vmatpush2.msra.mxu0 0.0
    %486 = vmatprep.subr.mxu0 0.0
    %487 = vmatpush2.msra.mxu0 0.0
    %488 = vmatprep.subr.mxu0 0.0
    %489 = vmatpush2.msra.mxu0 0.0
    %490 = vmatprep.subr.mxu0 0.0
    %491 = vmatpush2.msra.mxu0 0.0
    %492 = vmatprep.subr.mxu0 0.0
    %493 = vmatpush2.msra.mxu0 0.0
    %494 = vmatprep.subr.mxu0 0.0
    %495 = vmatpush2.msra.mxu0 0.0
    %496 = vmatprep.subr.mxu0 0.0
    %497 = vmatpush2.msra.mxu0 0.0
    %498 = vmatprep.subr.mxu0 0.0
    %499 = vmatpush2.msra.mxu0 0.0
    %500 = vmatprep.subr.mxu0 0.0
    %501 = vmatpush2.msra.mxu0 0.0
    %502 = vmatprep.subr.mxu0 0.0
    %503 = vmatpush2.msra.mxu0 0.0
    %504 = vmatprep.subr.mxu0 0.0
    %505 = vmatpush2.msra.mxu0 0.0
    %506 = vmatprep.subr.mxu0 0.0
    %507 = vmatpush2.msra.mxu0 0.0
    %508 = vmatprep.subr.mxu0 0.0
    %509 = vmatpush2.msra.mxu0 0.0
    %510 = vmatprep.subr.mxu0 0.0
    %511 = vmatpush2.msra.mxu0 0.0
    %512 = vmatprep.mubr.f32.mxu0 0.0
    %513 = vmatmul.mubr.f32.gmra.mxu0 %v422
    %v514 = vpop.f32.mrf.mxu0
    %v515 = vadd.f32 %v446, %v514
    %v516 = vpop.f32.mrf.mxu0
    %517 = vmatprep.mubr.f32.mxu0 0.0
    %518 = vmatmul.mubr.f32.gmra.mxu0 %v423
    %v519 = vpop.f32.mrf.mxu0
    %v520 = vadd.f32 %v446, %v519
    %v521 = vpop.f32.mrf.mxu0
    %522 = vmatprep.mubr.f32.mxu0 0.0
    %523 = vmatmul.mubr.f32.gmra.mxu0 %v424
    %v524 = vpop.f32.mrf.mxu0
    %v525 = vadd.f32 %v446, %v524
    %v526 = vpop.f32.mrf.mxu0
    %527 = vdwg.mxu0
    %v528 = vxor.u32 %v515, 2147483648
    %v529 = vxor.u32 %v520, 2147483648
    %v530 = vxor.u32 %v525, 2147483648
    %v531 = vmul.f32 %v528, 1.442695
    %v532 = vpow.pop %v531
    %v533 = vmul.f32 %v529, 1.442695
    %v534 = vpow.pop %v533
    %v535 = vmul.f32 %v530, 1.442695
    %v536 = vpow.pop %v535
    %v537 = vadd.f32 %v532, 1.0
    %v538 = vadd.f32 %v534, 1.0
    %v539 = vadd.f32 %v536, 1.0
    %v540 = vrcp.pop %v537
    %v541 = vmul.f32 1.0, %v540
    %v542 = vrcp.pop %v538
    %v543 = vmul.f32 1.0, %v542
    %v544 = vrcp.pop %v539
    %v545 = vmul.f32 1.0, %v544
    %546 = vst [vmem:[%s10] sm:$0xff] %v541
    %547 = vst [vmem:[%s10 + $0x8] sm:$0xff] %v543
    %548 = vst [vmem:[%s10 + $0x10] sm:$0xff] %v545
    // Predicated region
    $region58: #{vae_forward.1} parent=1 // pred_check
      _
    $region59: #{vae_forward.1} parent=1 // pred_check_branch
      %550 = sbr.rel (0) target = $region61
    $region60: #{vae_forward.1} parent=1 // pred_region
      _
    $region61: #{vae_forward.1} parent=1 // pred_fallthru
      _
    // Predicated region
    $region62: #{vae_forward.1} parent=1 // pred_check
      _
    $region63: #{vae_forward.1} parent=1 // pred_check_branch
      %552 = sbr.rel (0) target = $region65
    $region64: #{vae_forward.1} parent=1 // pred_region
      _
    $region65: #{vae_forward.1} parent=1 // pred_fallthru
      _
    // Predicated region
    $region66: #{vae_forward.1} parent=1 // pred_check
      _
    $region67: #{vae_forward.1} parent=1 // pred_check_branch
      %554 = sbr.rel (0) target = $region69
    $region68: #{vae_forward.1} parent=1 // pred_region
      _
    $region69: #{vae_forward.1} parent=1 // pred_fallthru
      _
    // Predicated region
    $region70: #{vae_forward.1} parent=1 // pred_check
      _
    $region71: #{vae_forward.1} parent=1 // pred_check_branch
      %556 = sbr.rel (0) target = $region73
    $region72: #{vae_forward.1} parent=1 // pred_region
      _
    $region73: #{vae_forward.1} parent=1 // pred_fallthru
      _
    // Predicated region
    $region74: #{vae_forward.1} parent=1 // pred_check
      _
    $region75: #{vae_forward.1} parent=1 // pred_check_branch
      %558 = sbr.rel (0) target = $region77
    $region76: #{vae_forward.1} parent=1 // pred_region
      _
    $region77: #{vae_forward.1} parent=1 // pred_fallthru
      _
    // Predicated region
    $region78: #{vae_forward.1} parent=1 // pred_check
      _
    $region79: #{vae_forward.1} parent=1 // pred_check_branch
      %560 = sbr.rel (0) target = $region81
    $region80: #{vae_forward.1} parent=1 // pred_region
      _
    $region81: #{vae_forward.1} parent=1 // pred_fallthru
      _
    %561 = vsyncpa [#allocation3], 1
    %562 = vsyncpa [#allocation5], 1
    %563 = vsyncpa [#allocation8], 1

</llo_original>
